<compile_context>
chip_gen: v5e
topology: v5e:2x2
jax: 0.10.0
libtpu: 0.0.40
codegen_flags: <defaults>
</compile_context>

<pallas_src>
import jax
import jax.numpy as jnp
from jax.experimental import pallas as pl
from jax.experimental.pallas import tpu as pltpu


def _ffn_kernel(x_ref, w13_ref, w2_ref, o_ref, acc_ref):
    # Grid: (row tiles i [parallel], hidden tiles j [arbitrary / reduction]).
    j = pl.program_id(1)

    @pl.when(j == 0)
    def _():
        acc_ref[...] = jnp.zeros_like(acc_ref)

    x = x_ref[...]                                                    # (tm, dim)
    # One wide MXU matmul for both gate projections: columns are [W1_j | W3_j].
    h13 = jnp.dot(x, w13_ref[...], preferred_element_type=jnp.float32)  # (tm, 2*tn)
    tn = h13.shape[-1] // 2
    h1 = h13[:, :tn]
    h3 = h13[:, tn:]
    gated = (h1 * jax.nn.sigmoid(h1)) * h3                            # silu(h1)*h3, f32
    # Partial down-projection for this hidden tile; accumulate in f32.
    acc_ref[...] += jnp.dot(gated.astype(w2_ref.dtype), w2_ref[...],
                            preferred_element_type=jnp.float32)       # (tm, dim)

    @pl.when(j == pl.num_programs(1) - 1)
    def _():
        o_ref[...] = acc_ref[...].astype(o_ref.dtype)


def _round_up(x, m):
    return (x + m - 1) // m * m


def feed_forward(x, w1, w3, w2, *, tm=256, tn=256):
    """x: [batch, seq, dim]; w1/w3: [dim, hidden]; w2: [hidden, dim]."""
    batch, seq, dim = x.shape
    hidden = w1.shape[1]
    assert w1.shape == (dim, hidden)
    assert w3.shape == (dim, hidden)
    assert w2.shape == (hidden, dim)

    M = batch * seq
    x2d = x.reshape(M, dim)

    # Effective tiles: clamp to the (aligned) problem size, keep HW alignment.
    tm_eff = min(tm, _round_up(M, 8))            # sublane multiple
    tn_eff = min(tn, _round_up(hidden, 128))     # lane multiple
    m_pad = _round_up(M, tm_eff)
    dim_pad = _round_up(dim, 128)                # lane-dense output stores
    hid_pad = _round_up(hidden, tn_eff)

    # Zero-padding is exact: silu(0) * 0 == 0 and zero weight rows/cols add 0.
    x2d = jnp.pad(x2d, ((0, m_pad - M), (0, dim_pad - dim)))
    w1p = jnp.pad(w1, ((0, dim_pad - dim), (0, hid_pad - hidden)))
    w3p = jnp.pad(w3, ((0, dim_pad - dim), (0, hid_pad - hidden)))
    w2p = jnp.pad(w2, ((0, hid_pad - hidden), (0, dim_pad - dim)))

    # Fuse W1/W3 so hidden-tile j occupies columns [j*2*tn, (j+1)*2*tn) laid
    # out as [W1_j | W3_j]; the kernel splits with static lane-aligned slices.
    nj = hid_pad // tn_eff
    w13 = jnp.concatenate(
        [w1p.reshape(dim_pad, nj, tn_eff), w3p.reshape(dim_pad, nj, tn_eff)],
        axis=-1,
    ).reshape(dim_pad, 2 * hid_pad)

    grid = (m_pad // tm_eff, nj)

    out2d = pl.pallas_call(
        _ffn_kernel,
        out_shape=jax.ShapeDtypeStruct((m_pad, dim_pad), x.dtype),
        grid_spec=pltpu.PrefetchScalarGridSpec(
            num_scalar_prefetch=0,
            grid=grid,
            in_specs=[
                pl.BlockSpec((tm_eff, dim_pad), lambda i, j: (i, 0)),       # x rows
                pl.BlockSpec((dim_pad, 2 * tn_eff), lambda i, j: (0, j)),   # [W1|W3] tile
                pl.BlockSpec((tn_eff, dim_pad), lambda i, j: (j, 0)),       # W2 tile
            ],
            out_specs=pl.BlockSpec((tm_eff, dim_pad), lambda i, j: (i, 0)),
            scratch_shapes=[pltpu.VMEM((tm_eff, dim_pad), jnp.float32)],    # f32 acc
        ),
        compiler_params=pltpu.CompilerParams(
            dimension_semantics=("parallel", "arbitrary"),
            vmem_limit_bytes=64 * 1024 * 1024,
        ),
    )(x2d, w13, w2p)

    return out2d[:M, :dim].reshape(batch, seq, dim)


def _hidden_dim_llama(hidden_dim, multiple_of):
    hidden_dim = int(2 * hidden_dim / 3)
    hidden_dim = multiple_of * ((hidden_dim + multiple_of - 1) // multiple_of)
    return hidden_dim


if __name__ == "__main__":
    # Small shapes consistent with the module's forward (dim kept a multiple
    # of 128 so toy blocks are already lane-dense).
    batch, seq, dim = 2, 8, 256
    hidden_dim_arg, multiple_of = 1024, 256
    hidden = _hidden_dim_llama(hidden_dim_arg, multiple_of)  # -> 768

    key = jax.random.PRNGKey(0)
    kx, k1, k2, k3 = jax.random.split(key, 4)
    x = jax.random.normal(kx, (batch, seq, dim), dtype=jnp.float32)
    # Deterministic synthetic weights (stored as [in, out] for x @ W).
    # TODO(synk): Column/RowParallelLinear tensor-model-parallel sharding is an
    # outer multi-device concern; this kernel implements the per-shard math.
    w1 = jax.random.normal(k1, (dim, hidden), dtype=jnp.float32) * 0.05
    w3 = jax.random.normal(k3, (dim, hidden), dtype=jnp.float32) * 0.05
    w2 = jax.random.normal(k2, (hidden, dim), dtype=jnp.float32) * 0.05

    y = feed_forward(x, w1, w3, w2)
    y = jax.block_until_ready(y)

    # Pure-JAX reference (same math as the PyTorch forward).
    h1 = jnp.dot(x, w1, preferred_element_type=jnp.float32)
    h3 = jnp.dot(x, w3, preferred_element_type=jnp.float32)
    ref = jnp.dot((h1 * jax.nn.sigmoid(h1)) * h3, w2,
                  preferred_element_type=jnp.float32)

    assert y.shape == (batch, seq, dim)
    assert jnp.allclose(y, ref, atol=1e-3, rtol=1e-3)

    print("KERNEL_OK")
</pallas_src>

<mosaic_0001>
module attributes {stable_mosaic.version = 11 : i64} {
  func.func @_ffn_kernel(%arg0: i32, %arg1: i32, %arg2: memref<16x256xf32, #tpu.memory_space<vmem>>, %arg3: memref<256x512xf32, #tpu.memory_space<vmem>>, %arg4: memref<256x256xf32, #tpu.memory_space<vmem>>, %arg5: memref<16x256xf32, #tpu.memory_space<vmem>>, %arg6: memref<16x256xf32, #tpu.memory_space<vmem>>) attributes {dimension_semantics = [#tpu.dimension_semantics<parallel>, #tpu.dimension_semantics<arbitrary>], iteration_bounds = array<i64: 1, 3>, scalar_prefetch = 0 : i64, scratch_operands = 1 : i64, tpu.core_type = #tpu.core_type<tc>, window_params = [{transform_indices = @transform_0, window_bounds = array<i64: 16, 256>}, {transform_indices = @transform_1, window_bounds = array<i64: 256, 512>}, {transform_indices = @transform_2, window_bounds = array<i64: 256, 256>}, {transform_indices = @transform_3, window_bounds = array<i64: 16, 256>}]} {
    %c0_i32 = arith.constant 0 : i32
    %0 = arith.cmpi eq, %arg1, %c0_i32 : i32
    %1 = arith.extui %0 : i1 to i32
    %c0_i32_0 = arith.constant 0 : i32
    %2 = arith.cmpi ne, %1, %c0_i32_0 : i32
    scf.if %2 {
      %cst_13 = arith.constant 0.000000e+00 : f32
      %23 = vector.broadcast %cst_13 : f32 to vector<16x256xf32>
      %c0_14 = arith.constant 0 : index
      %c0_15 = arith.constant 0 : index
      %24 = vector.load %arg6[%c0_14, %c0_15] : memref<16x256xf32, #tpu.memory_space<vmem>>, vector<16x256xf32>
      tpu.vector_store %arg6[%c0_14, %c0_15], %23 {strides = array<i32>} : memref<16x256xf32, #tpu.memory_space<vmem>>, vector<16x256xf32>,
    } else {
    }
    %c0 = arith.constant 0 : index
    %c0_1 = arith.constant 0 : index
    %3 = vector.load %arg2[%c0, %c0_1] : memref<16x256xf32, #tpu.memory_space<vmem>>, vector<16x256xf32>
    %c0_2 = arith.constant 0 : index
    %c0_3 = arith.constant 0 : index
    %4 = vector.load %arg3[%c0_2, %c0_3] : memref<256x512xf32, #tpu.memory_space<vmem>>, vector<256x512xf32>
    %cst = arith.constant dense<0.000000e+00> : vector<16x512xf32>
    %5 = tpu.matmul %3, %4, %cst {dimension_numbers = #tpu.dot_dimension_numbers<[1], [0], [0], [1], [0, 0, 1, 1], [], []>} : vector<16x256xf32>, vector<256x512xf32>, vector<16x512xf32> -> vector<16x512xf32>
    %6 = vector.extract_strided_slice %5 {offsets = [0, 0], sizes = [16, 256], strides = [1, 1]} : vector<16x512xf32> to vector<16x256xf32>
    %7 = vector.extract_strided_slice %5 {offsets = [0, 256], sizes = [16, 256], strides = [1, 1]} : vector<16x512xf32> to vector<16x256xf32>
    %8 = arith.negf %6 : vector<16x256xf32>
    %9 = math.exp %8 : vector<16x256xf32>
    %cst_4 = arith.constant 1.000000e+00 : f32
    %10 = vector.broadcast %cst_4 : f32 to vector<16x256xf32>
    %11 = arith.addf %10, %9 : vector<16x256xf32>
    %12 = arith.divf %10, %11 : vector<16x256xf32>
    %13 = arith.mulf %6, %12 : vector<16x256xf32>
    %14 = arith.mulf %13, %7 : vector<16x256xf32>
    %c0_5 = arith.constant 0 : index
    %c0_6 = arith.constant 0 : index
    %15 = vector.load %arg6[%c0_5, %c0_6] : memref<16x256xf32, #tpu.memory_space<vmem>>, vector<16x256xf32>
    %c0_7 = arith.constant 0 : index
    %c0_8 = arith.constant 0 : index
    %16 = vector.load %arg4[%c0_7, %c0_8] : memref<256x256xf32, #tpu.memory_space<vmem>>, vector<256x256xf32>
    %cst_9 = arith.constant dense<0.000000e+00> : vector<16x256xf32>
    %17 = tpu.matmul %14, %16, %cst_9 {dimension_numbers = #tpu.dot_dimension_numbers<[1], [0], [0], [1], [0, 0, 1, 1], [], []>} : vector<16x256xf32>, vector<256x256xf32>, vector<16x256xf32> -> vector<16x256xf32>
    %18 = arith.addf %15, %17 : vector<16x256xf32>
    %c0_10 = arith.constant 0 : index
    %c0_11 = arith.constant 0 : index
    %19 = vector.load %arg6[%c0_10, %c0_11] : memref<16x256xf32, #tpu.memory_space<vmem>>, vector<16x256xf32>
    tpu.vector_store %arg6[%c0_10, %c0_11], %18 {strides = array<i32>} : memref<16x256xf32, #tpu.memory_space<vmem>>, vector<16x256xf32>,
    %c2_i32 = arith.constant 2 : i32
    %20 = arith.cmpi eq, %arg1, %c2_i32 : i32
    %21 = arith.extui %20 : i1 to i32
    %c0_i32_12 = arith.constant 0 : i32
    %22 = arith.cmpi ne, %21, %c0_i32_12 : i32
    scf.if %22 {
      %c0_13 = arith.constant 0 : index
      %c0_14 = arith.constant 0 : index
      %23 = vector.load %arg6[%c0_13, %c0_14] : memref<16x256xf32, #tpu.memory_space<vmem>>, vector<16x256xf32>
      %c0_15 = arith.constant 0 : index
      %c0_16 = arith.constant 0 : index
      %24 = vector.load %arg5[%c0_15, %c0_16] : memref<16x256xf32, #tpu.memory_space<vmem>>, vector<16x256xf32>
      tpu.vector_store %arg5[%c0_15, %c0_16], %23 {strides = array<i32>} : memref<16x256xf32, #tpu.memory_space<vmem>>, vector<16x256xf32>,
    } else {
    }
    return
  }
  func.func @transform_0(%arg0: i32, %arg1: i32) -> (i32, i32) {
    %c0_i32 = arith.constant 0 : i32
    %c0_i32_0 = arith.constant 0 : i32
    return %arg0, %c0_i32 : i32, i32
  }
  func.func @transform_1(%arg0: i32, %arg1: i32) -> (i32, i32) {
    %c0_i32 = arith.constant 0 : i32
    %c0_i32_0 = arith.constant 0 : i32
    return %c0_i32, %arg1 : i32, i32
  }
  func.func @transform_2(%arg0: i32, %arg1: i32) -> (i32, i32) {
    %c0_i32 = arith.constant 0 : i32
    %c0_i32_0 = arith.constant 0 : i32
    return %arg1, %c0_i32 : i32, i32
  }
  func.func @transform_3(%arg0: i32, %arg1: i32) -> (i32, i32) {
    %c0_i32 = arith.constant 0 : i32
    %c0_i32_0 = arith.constant 0 : i32
    return %arg0, %c0_i32 : i32, i32
  }
}

</mosaic_0001>

<llo_original>
// kernel: tpu_custom_call.1
$region0: #{tpu_custom_call.1}
  #allocation0 [shape = 'u32[]', space=smem, size = 0x4, offset = 0x4, fixed_abs, tag = 'smem constant byte address 0x4 - core index']
  #allocation1 [shape = 'u32[72,128]{1,0:T(1,128)}', space=vmem, size = 0x9000, scoped, tag = 'internal scratch']
  #allocation2 [shape = 'f32[16,256]{1,0:T(8,128)}', space=vmem, size = 0x4000, scoped, tag = 'scratch operand']
  %s0 = inlined_call_operand.hbm [shape: f32[16,256], index: 0, kind: input, shape index: {}]
  %s1 = inlined_call_operand.hbm [shape: f32[256,1536], index: 1, kind: input, shape index: {}]
  %s2 = inlined_call_operand.hbm [shape: f32[768,256], index: 2, kind: input, shape index: {}]
  %s3 = inlined_call_operand.hbm [shape: f32[16,256], index: 3, kind: output, shape index: {}]
  %s4 = sld [smem:[#allocation0]]
  $region65: #{tpu_custom_call.1} parent=0
    _
  %s6 = ssub.s32 1, %s4
  %s7 = scalar_select 0, %s6, %s4
  $region1: #{tpu_custom_call.1} parent=0
    #allocation3 [shape = 'u8[16384]{0}', space=vmem, size = 0x4000, scoped, tag = 'input window, operand 0, single buffered']
    #allocation4 [shape = 's32[2]{0}', space=sflag, size = 0x8, scoped, tag = 'scoped memory for tpu_custom_call.1']
    #allocation5 [shape = 's32[2]{0}', space=sflag, size = 0x8, scoped, tag = 'scoped memory for tpu_custom_call.1']
    #allocation6 [shape = 'u8[1048576]{0}', space=vmem, size = 0x100000, scoped, tag = 'input window, operand 1']
    #allocation7 [shape = 's32[2]{0}', space=sflag, size = 0x8, scoped, tag = 'scoped memory for tpu_custom_call.1']
    #allocation8 [shape = 'u8[524288]{0}', space=vmem, size = 0x80000, scoped, tag = 'input window, operand 2']
    #allocation9 [shape = 'u8[16384]{0}', space=vmem, size = 0x4000, scoped, tag = 'output window, operand 0, single buffered']
    %8 = vsyncpa [#allocation4], 0
    %9 = vsyncpa [#allocation7], 0
    %s10 = scalar_lea.sflag [#allocation7], 1
    %11 = vsyncpa %s10, 0
    %12 = vsyncpa [#allocation5], 0
    loop: start=0, step=1, limit=5
    $region2: #{tpu_custom_call.1} parent=1 // loop_pre_header
      _
    $region3: #{tpu_custom_call.1} parent=1 // loop_header
      %s14 = sphi 0, %s18
      %p15 = scmp.ge.s32.totalorder %s14, 5
      %s21 = sphi 0, %s33
      %s22 = sphi 0, %s29
      %s23 = sphi 0, %s21
      %s24 = sphi 0, %s22
      %s25 = sphi 0, %s23
      %s26 = sphi 0, %s24
      %s36 = sphi 0, %s38
      %s39 = sphi 0, %s36
      %s40 = sphi 0, %s39
      %s56 = sphi 0, %s40
      %s62 = sphi 0, %s64
      %s65 = sphi 0, %s62
      %s66 = sphi 0, %s65
      %s82 = sphi 0, %s66
      %s88 = sphi 0, %s90
      %s91 = sphi 0, %s88
      %s92 = sphi 0, %s91
      %s108 = sphi 0, %s92
      %s114 = sphi 0, %s116
      %s117 = sphi 0, %s114
      %s118 = sphi 0, %s117
      %s134 = sphi 0, %s118
    $region4: #{tpu_custom_call.1} parent=1 // loop_header_branch
      %17 = sbr.rel (%p15) target = $region8
    $region5: #{tpu_custom_call.1} parent=1 // loop_body
      %s19 = ssub.s32 %s14, 1
      %s20 = ssub.s32 %s14, 2
      %s27 = sadd.s32 1, %s22
      %p28 = scmp.ge.s32.totalorder %s27, 3
      %s29 = scalar_select %p28, 0, %s27
      %s30 = sadd.s32 1, %s21
      %s31 = scalar_select %p28, %s30, %s21
      %p32 = scmp.ge.s32.totalorder %s31, 1
      %s33 = scalar_select %p32, 0, %s31
      %s34 = ssub.s32 %s21, %s33
      %p35 = scmp.eq.s32.totalorder %s34, 0
      %s37 = sadd.s32 %s36, 1
      %s38 = scalar_select %p35, %s36, %s37
      %p41 = pneg %p35
      %p42 = scmp.eq.s32.totalorder %s14, 2
      %p43 = por %p41, %p42
      %p44 = scmp.ne.s32.totalorder %s36, %s39
      %p45 = scmp.eq.s32.totalorder %s14, 0
      %p46 = por %p44, %p45
      %p47 = scmp.ne.s32.totalorder %s36, %s39
      %p48 = scmp.eq.s32.totalorder %s19, 2
      %p49 = por %p47, %p48
      %p50 = scmp.ne.s32.totalorder %s39, %s40
      %p51 = scmp.eq.s32.totalorder %s19, 0
      %p52 = por %p50, %p51
      %p53 = scmp.ne.s32.totalorder %s39, %s40
      %p54 = scmp.eq.s32.totalorder %s20, 2
      %p55 = por %p53, %p54
      %p57 = scmp.ne.s32.totalorder %s40, %s56
      %p58 = scmp.eq.s32.totalorder %s20, 0
      %p59 = por %p57, %p58
      %s60 = ssub.s32 %s22, %s29
      %p61 = scmp.eq.s32.totalorder %s60, 0
      %s63 = sadd.s32 %s62, 1
      %s64 = scalar_select %p61, %s62, %s63
      %p67 = pneg %p61
      %p68 = scmp.eq.s32.totalorder %s14, 2
      %p69 = por %p67, %p68
      %p70 = scmp.ne.s32.totalorder %s62, %s65
      %p71 = scmp.eq.s32.totalorder %s14, 0
      %p72 = por %p70, %p71
      %p73 = scmp.ne.s32.totalorder %s62, %s65
      %p74 = scmp.eq.s32.totalorder %s19, 2
      %p75 = por %p73, %p74
      %p76 = scmp.ne.s32.totalorder %s65, %s66
      %p77 = scmp.eq.s32.totalorder %s19, 0
      %p78 = por %p76, %p77
      %p79 = scmp.ne.s32.totalorder %s65, %s66
      %p80 = scmp.eq.s32.totalorder %s20, 2
      %p81 = por %p79, %p80
      %p83 = scmp.ne.s32.totalorder %s66, %s82
      %p84 = scmp.eq.s32.totalorder %s20, 0
      %p85 = por %p83, %p84
      %s86 = ssub.s32 %s22, %s29
      %p87 = scmp.eq.s32.totalorder %s86, 0
      %s89 = sadd.s32 %s88, 1
      %s90 = scalar_select %p87, %s88, %s89
      %p93 = pneg %p87
      %p94 = scmp.eq.s32.totalorder %s14, 2
      %p95 = por %p93, %p94
      %p96 = scmp.ne.s32.totalorder %s88, %s91
      %p97 = scmp.eq.s32.totalorder %s14, 0
      %p98 = por %p96, %p97
      %p99 = scmp.ne.s32.totalorder %s88, %s91
      %p100 = scmp.eq.s32.totalorder %s19, 2
      %p101 = por %p99, %p100
      %p102 = scmp.ne.s32.totalorder %s91, %s92
      %p103 = scmp.eq.s32.totalorder %s19, 0
      %p104 = por %p102, %p103
      %p105 = scmp.ne.s32.totalorder %s91, %s92
      %p106 = scmp.eq.s32.totalorder %s20, 2
      %p107 = por %p105, %p106
      %p109 = scmp.ne.s32.totalorder %s92, %s108
      %p110 = scmp.eq.s32.totalorder %s20, 0
      %p111 = por %p109, %p110
      %s112 = ssub.s32 %s21, %s33
      %p113 = scmp.eq.s32.totalorder %s112, 0
      %s115 = sadd.s32 %s114, 1
      %s116 = scalar_select %p113, %s114, %s115
      %p119 = pneg %p113
      %p120 = scmp.eq.s32.totalorder %s14, 2
      %p121 = por %p119, %p120
      %p122 = scmp.ne.s32.totalorder %s114, %s117
      %p123 = scmp.eq.s32.totalorder %s14, 0
      %p124 = por %p122, %p123
      %p125 = scmp.ne.s32.totalorder %s114, %s117
      %p126 = scmp.eq.s32.totalorder %s19, 2
      %p127 = por %p125, %p126
      %p128 = scmp.ne.s32.totalorder %s117, %s118
      %p129 = scmp.eq.s32.totalorder %s19, 0
      %p130 = por %p128, %p129
      %p131 = scmp.ne.s32.totalorder %s117, %s118
      %p132 = scmp.eq.s32.totalorder %s20, 2
      %p133 = por %p131, %p132
      %p135 = scmp.ne.s32.totalorder %s118, %s134
      %p136 = scmp.eq.s32.totalorder %s20, 0
      %p137 = por %p135, %p136
      %p138 = scmp.le.s32.totalorder 1, %s14
      %p139 = scmp.lt.s32.totalorder %s14, 4
      %p140 = pnand %p138, %p139
      %p141 = pneg %p140
      // Predicated region
      $region9: #{tpu_custom_call.1} parent=5 // pred_check
        _
      $region10: #{tpu_custom_call.1} parent=5 // pred_check_branch
        %143 = sbr.rel (%p140) target = $region12
      $region11: #{tpu_custom_call.1} parent=5 // pred_region
        %s144 = ssub.s32 %s14, 1
        // Predicated region
        $region13: #{tpu_custom_call.1} parent=11 // pred_check
          %p145 = pneg %p52
        $region14: #{tpu_custom_call.1} parent=11 // pred_check_branch
          %147 = sbr.rel (%p145) target = $region16
        $region15: #{tpu_custom_call.1} parent=11 // pred_region
          %s148 = smul.u32 2, %s23
          %150 = vsyncadd [#allocation4], 0
          %s151 = smul.addr %s148, 2
          %s152 = smul.addr %s151, 8
          %s153 = scalar_lea.hbm %s0, %s152
          %s154 = sshll.u32 %s153, 4
          %s155 = int_to_ptr.hbm [resolvable:$true] %s154
          %s156 = sshll.u32 [#allocation3], 4
          %s157 = int_to_ptr.vmem [resolvable:$true] %s156
          %162 = dma.hbm_to_vmem [thread:$0]  %s155, 512, %s157, [#allocation4], 256, 256, 16
        $region16: #{tpu_custom_call.1} parent=11 // pred_fallthru
          _
      $region12: #{tpu_custom_call.1} parent=5 // pred_fallthru
        _
      %p163 = scmp.lt.s32.totalorder %s14, 3
      // Predicated region
      $region17: #{tpu_custom_call.1} parent=5 // pred_check
        %p164 = pneg %p163
      $region18: #{tpu_custom_call.1} parent=5 // pred_check_branch
        %166 = sbr.rel (%p164) target = $region20
      $region19: #{tpu_custom_call.1} parent=5 // pred_region
        // Predicated region
        $region21: #{tpu_custom_call.1} parent=19 // pred_check
          %p167 = pneg %p72
        $region22: #{tpu_custom_call.1} parent=19 // pred_check_branch
          %169 = sbr.rel (%p167) target = $region24
        $region23: #{tpu_custom_call.1} parent=19 // pred_region
          %s170 = sand.u32 %s14, 1
          %s171 = scalar_lea.sflag [#allocation7], %s170
          %s172 = sand.u32 %s62, 1
          %s173 = smul.addr %s172, 1024
          %s174 = scalar_lea.vmem [#allocation6], %s173
          %s175 = smul.u32 4, %s22
          %177 = vsyncadd %s171, 0
          %s178 = smul.addr %s175, 8
          %s179 = scalar_lea.hbm %s1, %s178
          %s180 = sshll.u32 %s179, 4
          %s181 = int_to_ptr.hbm [resolvable:$true] %s180
          %s182 = sshll.u32 %s174, 4
          %s183 = int_to_ptr.vmem [resolvable:$true] %s182
          %188 = dma.hbm_to_vmem [thread:$0]  %s181, 16384, %s183, %s171, 1536, 512, 32
        $region24: #{tpu_custom_call.1} parent=19 // pred_fallthru
          _
        // Predicated region
        $region25: #{tpu_custom_call.1} parent=19 // pred_check
          %p189 = pneg %p98
        $region26: #{tpu_custom_call.1} parent=19 // pred_check_branch
          %191 = sbr.rel (%p189) target = $region28
        $region27: #{tpu_custom_call.1} parent=19 // pred_region
          %s192 = sand.u32 %s14, 1
          %s193 = scalar_lea.sflag [#allocation7], %s192
          %s194 = sand.u32 %s88, 1
          %s195 = smul.addr %s194, 512
          %s196 = scalar_lea.vmem [#allocation8], %s195
          %s197 = smul.u32 32, %s22
          %199 = vsyncadd %s193, 0
          %s200 = smul.addr %s197, 2
          %s201 = smul.addr %s200, 8
          %s202 = scalar_lea.hbm %s2, %s201
          %s203 = sshll.u32 %s202, 4
          %s204 = int_to_ptr.hbm [resolvable:$true] %s203
          %s205 = sshll.u32 %s196, 4
          %s206 = int_to_ptr.vmem [resolvable:$true] %s205
          %211 = dma.hbm_to_vmem [thread:$0]  %s204, 8192, %s206, %s193, 256, 256, 16
        $region28: #{tpu_custom_call.1} parent=19 // pred_fallthru
          _
      $region20: #{tpu_custom_call.1} parent=5 // pred_fallthru
        _
      %p212 = scmp.le.s32.totalorder 1, %s14
      %p213 = scmp.lt.s32.totalorder %s14, 4
      %p214 = pnand %p212, %p213
      %p215 = pneg %p214
      // Predicated region
      $region29: #{tpu_custom_call.1} parent=5 // pred_check
        _
      $region30: #{tpu_custom_call.1} parent=5 // pred_check_branch
        %217 = sbr.rel (%p214) target = $region32
      $region31: #{tpu_custom_call.1} parent=5 // pred_region
        %s218 = ssub.s32 %s14, 1
        // Predicated region
        $region33: #{tpu_custom_call.1} parent=31 // pred_check
          %p219 = pneg %p52
        $region34: #{tpu_custom_call.1} parent=31 // pred_check_branch
          %221 = sbr.rel (%p219) target = $region36
        $region35: #{tpu_custom_call.1} parent=31 // pred_region
          %223 = dma.done [#allocation4], 512
        $region36: #{tpu_custom_call.1} parent=31 // pred_fallthru
          _
        %s224 = sand.u32 %s19, 1
        %s225 = scalar_lea.sflag [#allocation7], %s224
        %s226 = sand.u32 %s65, 1
        %s227 = smul.addr %s226, 1024
        %s228 = scalar_lea.vmem [#allocation6], %s227
        // Predicated region
        $region37: #{tpu_custom_call.1} parent=31 // pred_check
          %p229 = pneg %p78
        $region38: #{tpu_custom_call.1} parent=31 // pred_check_branch
          %231 = sbr.rel (%p229) target = $region40
        $region39: #{tpu_custom_call.1} parent=31 // pred_region
          %233 = dma.done %s225, 16384
        $region40: #{tpu_custom_call.1} parent=31 // pred_fallthru
          _
        %s234 = sand.u32 %s19, 1
        %s235 = scalar_lea.sflag [#allocation7], %s234
        %s236 = sand.u32 %s91, 1
        %s237 = smul.addr %s236, 512
        %s238 = scalar_lea.vmem [#allocation8], %s237
        // Predicated region
        $region41: #{tpu_custom_call.1} parent=31 // pred_check
          %p239 = pneg %p104
        $region42: #{tpu_custom_call.1} parent=31 // pred_check_branch
          %241 = sbr.rel (%p239) target = $region44
        $region43: #{tpu_custom_call.1} parent=31 // pred_region
          %243 = dma.done %s235, 8192
        $region44: #{tpu_custom_call.1} parent=31 // pred_fallthru
          _
        %p244 = pneg %p52
        %p245 = pneg %p49
        %s246 = sand.u32 %s19, 1
        %s247 = scalar_lea.sflag [#allocation7], %s246
        %s248 = sand.u32 %s65, 1
        %s249 = smul.addr %s248, 1024
        %s250 = scalar_lea.vmem [#allocation6], %s249
        %p251 = pneg %p78
        %p252 = pneg %p75
        %s253 = sand.u32 %s19, 1
        %s254 = scalar_lea.sflag [#allocation7], %s253
        %s255 = sand.u32 %s91, 1
        %s256 = smul.addr %s255, 512
        %s257 = scalar_lea.vmem [#allocation8], %s256
        %p258 = pneg %p104
        %p259 = pneg %p101
        %p260 = pneg %p130
        %p261 = pneg %p127
        %s262 = smul.u32 2, %s23
        %s263 = smul.u32 4, %s24
        %s264 = smul.u32 32, %s24
        %s265 = smul.u32 2, %s23
        %p266 = scmp.eq.s32.totalorder %s24, 0
        // Predicated region
        $region45: #{tpu_custom_call.1} parent=31 // pred_check
          %p267 = pneg %p266
        $region46: #{tpu_custom_call.1} parent=31 // pred_check_branch
          %269 = sbr.rel (%p267) target = $region48
        $region47: #{tpu_custom_call.1} parent=31 // pred_region
          %270 = vst [vmem:[#allocation2] sm:$0xff] 0.0
          %271 = vst [vmem:[#allocation2 + $0x8] sm:$0xff] 0.0
          %272 = vst [vmem:[#allocation2 + $0x10] sm:$0xff] 0.0
          %273 = vst [vmem:[#allocation2 + $0x18] sm:$0xff] 0.0
        $region48: #{tpu_custom_call.1} parent=31 // pred_fallthru
          _
        %v274 = vld [vmem:[#allocation3] sm:$0xff]
        %v275 = vld [vmem:[#allocation3 + $0x8] sm:$0xff]
        %v276 = vld [vmem:[#allocation3 + $0x10] sm:$0xff]
        %v277 = vld [vmem:[#allocation3 + $0x18] sm:$0xff]
        %v278 = vld [vmem:[%s228] sm:$0xff]
        %v279 = vld [vmem:[%s228 + $0x8] sm:$0xff]
        %v280 = vld [vmem:[%s228 + $0x10] sm:$0xff]
        %v281 = vld [vmem:[%s228 + $0x18] sm:$0xff]
        %v282 = vld [vmem:[%s228 + $0x20] sm:$0xff]
        %v283 = vld [vmem:[%s228 + $0x28] sm:$0xff]
        %v284 = vld [vmem:[%s228 + $0x30] sm:$0xff]
        %v285 = vld [vmem:[%s228 + $0x38] sm:$0xff]
        %v286 = vld [vmem:[%s228 + $0x40] sm:$0xff]
        %v287 = vld [vmem:[%s228 + $0x48] sm:$0xff]
        %v288 = vld [vmem:[%s228 + $0x50] sm:$0xff]
        %v289 = vld [vmem:[%s228 + $0x58] sm:$0xff]
        %v290 = vld [vmem:[%s228 + $0x60] sm:$0xff]
        %v291 = vld [vmem:[%s228 + $0x68] sm:$0xff]
        %v292 = vld [vmem:[%s228 + $0x70] sm:$0xff]
        %v293 = vld [vmem:[%s228 + $0x78] sm:$0xff]
        %v294 = vld [vmem:[%s228 + $0x80] sm:$0xff]
        %v295 = vld [vmem:[%s228 + $0x88] sm:$0xff]
        %v296 = vld [vmem:[%s228 + $0x90] sm:$0xff]
        %v297 = vld [vmem:[%s228 + $0x98] sm:$0xff]
        %v298 = vld [vmem:[%s228 + $0xa0] sm:$0xff]
        %v299 = vld [vmem:[%s228 + $0xa8] sm:$0xff]
        %v300 = vld [vmem:[%s228 + $0xb0] sm:$0xff]
        %v301 = vld [vmem:[%s228 + $0xb8] sm:$0xff]
        %v302 = vld [vmem:[%s228 + $0xc0] sm:$0xff]
        %v303 = vld [vmem:[%s228 + $0xc8] sm:$0xff]
        %v304 = vld [vmem:[%s228 + $0xd0] sm:$0xff]
        %v305 = vld [vmem:[%s228 + $0xd8] sm:$0xff]
        %v306 = vld [vmem:[%s228 + $0xe0] sm:$0xff]
        %v307 = vld [vmem:[%s228 + $0xe8] sm:$0xff]
        %v308 = vld [vmem:[%s228 + $0xf0] sm:$0xff]
        %v309 = vld [vmem:[%s228 + $0xf8] sm:$0xff]
        %v310 = vld [vmem:[%s228 + $0x100] sm:$0xff]
        %v311 = vld [vmem:[%s228 + $0x108] sm:$0xff]
        %v312 = vld [vmem:[%s228 + $0x110] sm:$0xff]
        %v313 = vld [vmem:[%s228 + $0x118] sm:$0xff]
        %v314 = vld [vmem:[%s228 + $0x120] sm:$0xff]
        %v315 = vld [vmem:[%s228 + $0x128] sm:$0xff]
        %v316 = vld [vmem:[%s228 + $0x130] sm:$0xff]
        %v317 = vld [vmem:[%s228 + $0x138] sm:$0xff]
        %v318 = vld [vmem:[%s228 + $0x140] sm:$0xff]
        %v319 = vld [vmem:[%s228 + $0x148] sm:$0xff]
        %v320 = vld [vmem:[%s228 + $0x150] sm:$0xff]
        %v321 = vld [vmem:[%s228 + $0x158] sm:$0xff]
        %v322 = vld [vmem:[%s228 + $0x160] sm:$0xff]
        %v323 = vld [vmem:[%s228 + $0x168] sm:$0xff]
        %v324 = vld [vmem:[%s228 + $0x170] sm:$0xff]
        %v325 = vld [vmem:[%s228 + $0x178] sm:$0xff]
        %v326 = vld [vmem:[%s228 + $0x180] sm:$0xff]
        %v327 = vld [vmem:[%s228 + $0x188] sm:$0xff]
        %v328 = vld [vmem:[%s228 + $0x190] sm:$0xff]
        %v329 = vld [vmem:[%s228 + $0x198] sm:$0xff]
        %v330 = vld [vmem:[%s228 + $0x1a0] sm:$0xff]
        %v331 = vld [vmem:[%s228 + $0x1a8] sm:$0xff]
        %v332 = vld [vmem:[%s228 + $0x1b0] sm:$0xff]
        %v333 = vld [vmem:[%s228 + $0x1b8] sm:$0xff]
        %v334 = vld [vmem:[%s228 + $0x1c0] sm:$0xff]
        %v335 = vld [vmem:[%s228 + $0x1c8] sm:$0xff]
        %v336 = vld [vmem:[%s228 + $0x1d0] sm:$0xff]
        %v337 = vld [vmem:[%s228 + $0x1d8] sm:$0xff]
        %v338 = vld [vmem:[%s228 + $0x1e0] sm:$0xff]
        %v339 = vld [vmem:[%s228 + $0x1e8] sm:$0xff]
        %v340 = vld [vmem:[%s228 + $0x1f0] sm:$0xff]
        %v341 = vld [vmem:[%s228 + $0x1f8] sm:$0xff]
        %v342 = vld [vmem:[%s228 + $0x200] sm:$0xff]
        %v343 = vld [vmem:[%s228 + $0x208] sm:$0xff]
        %v344 = vld [vmem:[%s228 + $0x210] sm:$0xff]
        %v345 = vld [vmem:[%s228 + $0x218] sm:$0xff]
        %v346 = vld [vmem:[%s228 + $0x220] sm:$0xff]
        %v347 = vld [vmem:[%s228 + $0x228] sm:$0xff]
        %v348 = vld [vmem:[%s228 + $0x230] sm:$0xff]
        %v349 = vld [vmem:[%s228 + $0x238] sm:$0xff]
        %v350 = vld [vmem:[%s228 + $0x240] sm:$0xff]
        %v351 = vld [vmem:[%s228 + $0x248] sm:$0xff]
        %v352 = vld [vmem:[%s228 + $0x250] sm:$0xff]
        %v353 = vld [vmem:[%s228 + $0x258] sm:$0xff]
        %v354 = vld [vmem:[%s228 + $0x260] sm:$0xff]
        %v355 = vld [vmem:[%s228 + $0x268] sm:$0xff]
        %v356 = vld [vmem:[%s228 + $0x270] sm:$0xff]
        %v357 = vld [vmem:[%s228 + $0x278] sm:$0xff]
        %v358 = vld [vmem:[%s228 + $0x280] sm:$0xff]
        %v359 = vld [vmem:[%s228 + $0x288] sm:$0xff]
        %v360 = vld [vmem:[%s228 + $0x290] sm:$0xff]
        %v361 = vld [vmem:[%s228 + $0x298] sm:$0xff]
        %v362 = vld [vmem:[%s228 + $0x2a0] sm:$0xff]
        %v363 = vld [vmem:[%s228 + $0x2a8] sm:$0xff]
        %v364 = vld [vmem:[%s228 + $0x2b0] sm:$0xff]
        %v365 = vld [vmem:[%s228 + $0x2b8] sm:$0xff]
        %v366 = vld [vmem:[%s228 + $0x2c0] sm:$0xff]
        %v367 = vld [vmem:[%s228 + $0x2c8] sm:$0xff]
        %v368 = vld [vmem:[%s228 + $0x2d0] sm:$0xff]
        %v369 = vld [vmem:[%s228 + $0x2d8] sm:$0xff]
        %v370 = vld [vmem:[%s228 + $0x2e0] sm:$0xff]
        %v371 = vld [vmem:[%s228 + $0x2e8] sm:$0xff]
        %v372 = vld [vmem:[%s228 + $0x2f0] sm:$0xff]
        %v373 = vld [vmem:[%s228 + $0x2f8] sm:$0xff]
        %v374 = vld [vmem:[%s228 + $0x300] sm:$0xff]
        %v375 = vld [vmem:[%s228 + $0x308] sm:$0xff]
        %v376 = vld [vmem:[%s228 + $0x310] sm:$0xff]
        %v377 = vld [vmem:[%s228 + $0x318] sm:$0xff]
        %v378 = vld [vmem:[%s228 + $0x320] sm:$0xff]
        %v379 = vld [vmem:[%s228 + $0x328] sm:$0xff]
        %v380 = vld [vmem:[%s228 + $0x330] sm:$0xff]
        %v381 = vld [vmem:[%s228 + $0x338] sm:$0xff]
        %v382 = vld [vmem:[%s228 + $0x340] sm:$0xff]
        %v383 = vld [vmem:[%s228 + $0x348] sm:$0xff]
        %v384 = vld [vmem:[%s228 + $0x350] sm:$0xff]
        %v385 = vld [vmem:[%s228 + $0x358] sm:$0xff]
        %v386 = vld [vmem:[%s228 + $0x360] sm:$0xff]
        %v387 = vld [vmem:[%s228 + $0x368] sm:$0xff]
        %v388 = vld [vmem:[%s228 + $0x370] sm:$0xff]
        %v389 = vld [vmem:[%s228 + $0x378] sm:$0xff]
        %v390 = vld [vmem:[%s228 + $0x380] sm:$0xff]
        %v391 = vld [vmem:[%s228 + $0x388] sm:$0xff]
        %v392 = vld [vmem:[%s228 + $0x390] sm:$0xff]
        %v393 = vld [vmem:[%s228 + $0x398] sm:$0xff]
        %v394 = vld [vmem:[%s228 + $0x3a0] sm:$0xff]
        %v395 = vld [vmem:[%s228 + $0x3a8] sm:$0xff]
        %v396 = vld [vmem:[%s228 + $0x3b0] sm:$0xff]
        %v397 = vld [vmem:[%s228 + $0x3b8] sm:$0xff]
        %v398 = vld [vmem:[%s228 + $0x3c0] sm:$0xff]
        %v399 = vld [vmem:[%s228 + $0x3c8] sm:$0xff]
        %v400 = vld [vmem:[%s228 + $0x3d0] sm:$0xff]
        %v401 = vld [vmem:[%s228 + $0x3d8] sm:$0xff]
        %v402 = vld [vmem:[%s228 + $0x3e0] sm:$0xff]
        %v403 = vld [vmem:[%s228 + $0x3e8] sm:$0xff]
        %v404 = vld [vmem:[%s228 + $0x3f0] sm:$0xff]
        %v405 = vld [vmem:[%s228 + $0x3f8] sm:$0xff]
        %406 = vmatpush.msra.mxu0 %v338
        %407 = vmatpush.msra.mxu0 %v334
        %408 = vmatpush.msra.mxu0 %v330
        %409 = vmatpush.msra.mxu0 %v326
        %410 = vmatpush.msra.mxu0 %v322
        %411 = vmatpush.msra.mxu0 %v318
        %412 = vmatpush.msra.mxu0 %v314
        %413 = vmatpush.msra.mxu0 %v310
        %414 = vmatpush.msra.mxu0 %v306
        %415 = vmatpush.msra.mxu0 %v302
        %416 = vmatpush.msra.mxu0 %v298
        %417 = vmatpush.msra.mxu0 %v294
        %418 = vmatpush.msra.mxu0 %v290
        %419 = vmatpush.msra.mxu0 %v286
        %420 = vmatpush.msra.mxu0 %v282
        %421 = vmatpush.msra.mxu0 %v278
        %422 = vmatmul.f32.gmra.mxu0 %v274
        %v423 = vpop.f32.mrf.mxu0
        %v424 = vadd.f32 0.0, %v423
        %425 = vmatmul.f32.gmra.mxu0 %v276
        %v426 = vpop.f32.mrf.mxu0
        %v427 = vadd.f32 0.0, %v426
        %428 = vdwg.mxu0
        %429 = vmatpush.msra.mxu0 %v402
        %430 = vmatpush.msra.mxu0 %v398
        %431 = vmatpush.msra.mxu0 %v394
        %432 = vmatpush.msra.mxu0 %v390
        %433 = vmatpush.msra.mxu0 %v386
        %434 = vmatpush.msra.mxu0 %v382
        %435 = vmatpush.msra.mxu0 %v378
        %436 = vmatpush.msra.mxu0 %v374
        %437 = vmatpush.msra.mxu0 %v370
        %438 = vmatpush.msra.mxu0 %v366
        %439 = vmatpush.msra.mxu0 %v362
        %440 = vmatpush.msra.mxu0 %v358
        %441 = vmatpush.msra.mxu0 %v354
        %442 = vmatpush.msra.mxu0 %v350
        %443 = vmatpush.msra.mxu0 %v346
        %444 = vmatpush.msra.mxu0 %v342
        %445 = vmatmul.f32.gmra.mxu0 %v275
        %v446 = vpop.f32.mrf.mxu0
        %v447 = vadd.f32 %v424, %v446
        %448 = vmatmul.f32.gmra.mxu0 %v277
        %v449 = vpop.f32.mrf.mxu0
        %v450 = vadd.f32 %v427, %v449
        %451 = vdwg.mxu0
        %452 = vmatpush.msra.mxu0 %v339
        %453 = vmatpush.msra.mxu0 %v335
        %454 = vmatpush.msra.mxu0 %v331
        %455 = vmatpush.msra.mxu0 %v327
        %456 = vmatpush.msra.mxu0 %v323
        %457 = vmatpush.msra.mxu0 %v319
        %458 = vmatpush.msra.mxu0 %v315
        %459 = vmatpush.msra.mxu0 %v311
        %460 = vmatpush.msra.mxu0 %v307
        %461 = vmatpush.msra.mxu0 %v303
        %462 = vmatpush.msra.mxu0 %v299
        %463 = vmatpush.msra.mxu0 %v295
        %464 = vmatpush.msra.mxu0 %v291
        %465 = vmatpush.msra.mxu0 %v287
        %466 = vmatpush.msra.mxu0 %v283
        %467 = vmatpush.msra.mxu0 %v279
        %468 = vmatmul.f32.gmra.mxu0 %v274
        %v469 = vpop.f32.mrf.mxu0
        %v470 = vadd.f32 0.0, %v469
        %471 = vmatmul.f32.gmra.mxu0 %v276
        %v472 = vpop.f32.mrf.mxu0
        %v473 = vadd.f32 0.0, %v472
        %474 = vdwg.mxu0
        %475 = vmatpush.msra.mxu0 %v403
        %476 = vmatpush.msra.mxu0 %v399
        %477 = vmatpush.msra.mxu0 %v395
        %478 = vmatpush.msra.mxu0 %v391
        %479 = vmatpush.msra.mxu0 %v387
        %480 = vmatpush.msra.mxu0 %v383
        %481 = vmatpush.msra.mxu0 %v379
        %482 = vmatpush.msra.mxu0 %v375
        %483 = vmatpush.msra.mxu0 %v371
        %484 = vmatpush.msra.mxu0 %v367
        %485 = vmatpush.msra.mxu0 %v363
        %486 = vmatpush.msra.mxu0 %v359
        %487 = vmatpush.msra.mxu0 %v355
        %488 = vmatpush.msra.mxu0 %v351
        %489 = vmatpush.msra.mxu0 %v347
        %490 = vmatpush.msra.mxu0 %v343
        %491 = vmatmul.f32.gmra.mxu0 %v275
        %v492 = vpop.f32.mrf.mxu0
        %v493 = vadd.f32 %v470, %v492
        %494 = vmatmul.f32.gmra.mxu0 %v277
        %v495 = vpop.f32.mrf.mxu0
        %v496 = vadd.f32 %v473, %v495
        %497 = vdwg.mxu0
        %498 = vmatpush.msra.mxu0 %v340
        %499 = vmatpush.msra.mxu0 %v336
        %500 = vmatpush.msra.mxu0 %v332
        %501 = vmatpush.msra.mxu0 %v328
        %502 = vmatpush.msra.mxu0 %v324
        %503 = vmatpush.msra.mxu0 %v320
        %504 = vmatpush.msra.mxu0 %v316
        %505 = vmatpush.msra.mxu0 %v312
        %506 = vmatpush.msra.mxu0 %v308
        %507 = vmatpush.msra.mxu0 %v304
        %508 = vmatpush.msra.mxu0 %v300
        %509 = vmatpush.msra.mxu0 %v296
        %510 = vmatpush.msra.mxu0 %v292
        %511 = vmatpush.msra.mxu0 %v288
        %512 = vmatpush.msra.mxu0 %v284
        %513 = vmatpush.msra.mxu0 %v280
        %514 = vmatmul.f32.gmra.mxu0 %v274
        %v515 = vpop.f32.mrf.mxu0
        %v516 = vadd.f32 0.0, %v515
        %517 = vmatmul.f32.gmra.mxu0 %v276
        %v518 = vpop.f32.mrf.mxu0
        %v519 = vadd.f32 0.0, %v518
        %520 = vdwg.mxu0
        %521 = vmatpush.msra.mxu0 %v404
        %522 = vmatpush.msra.mxu0 %v400
        %523 = vmatpush.msra.mxu0 %v396
        %524 = vmatpush.msra.mxu0 %v392
        %525 = vmatpush.msra.mxu0 %v388
        %526 = vmatpush.msra.mxu0 %v384
        %527 = vmatpush.msra.mxu0 %v380
        %528 = vmatpush.msra.mxu0 %v376
        %529 = vmatpush.msra.mxu0 %v372
        %530 = vmatpush.msra.mxu0 %v368
        %531 = vmatpush.msra.mxu0 %v364
        %532 = vmatpush.msra.mxu0 %v360
        %533 = vmatpush.msra.mxu0 %v356
        %534 = vmatpush.msra.mxu0 %v352
        %535 = vmatpush.msra.mxu0 %v348
        %536 = vmatpush.msra.mxu0 %v344
        %537 = vmatmul.f32.gmra.mxu0 %v275
        %v538 = vpop.f32.mrf.mxu0
        %v539 = vadd.f32 %v516, %v538
        %540 = vmatmul.f32.gmra.mxu0 %v277
        %v541 = vpop.f32.mrf.mxu0
        %v542 = vadd.f32 %v519, %v541
        %543 = vdwg.mxu0
        %544 = vmatpush.msra.mxu0 %v341
        %545 = vmatpush.msra.mxu0 %v337
        %546 = vmatpush.msra.mxu0 %v333
        %547 = vmatpush.msra.mxu0 %v329
        %548 = vmatpush.msra.mxu0 %v325
        %549 = vmatpush.msra.mxu0 %v321
        %550 = vmatpush.msra.mxu0 %v317
        %551 = vmatpush.msra.mxu0 %v313
        %552 = vmatpush.msra.mxu0 %v309
        %553 = vmatpush.msra.mxu0 %v305
        %554 = vmatpush.msra.mxu0 %v301
        %555 = vmatpush.msra.mxu0 %v297
        %556 = vmatpush.msra.mxu0 %v293
        %557 = vmatpush.msra.mxu0 %v289
        %558 = vmatpush.msra.mxu0 %v285
        %559 = vmatpush.msra.mxu0 %v281
        %560 = vmatmul.f32.gmra.mxu0 %v274
        %v561 = vpop.f32.mrf.mxu0
        %v562 = vadd.f32 0.0, %v561
        %563 = vmatmul.f32.gmra.mxu0 %v276
        %v564 = vpop.f32.mrf.mxu0
        %v565 = vadd.f32 0.0, %v564
        %566 = vdwg.mxu0
        %567 = vmatpush.msra.mxu0 %v405
        %568 = vmatpush.msra.mxu0 %v401
        %569 = vmatpush.msra.mxu0 %v397
        %570 = vmatpush.msra.mxu0 %v393
        %571 = vmatpush.msra.mxu0 %v389
        %572 = vmatpush.msra.mxu0 %v385
        %573 = vmatpush.msra.mxu0 %v381
        %574 = vmatpush.msra.mxu0 %v377
        %575 = vmatpush.msra.mxu0 %v373
        %576 = vmatpush.msra.mxu0 %v369
        %577 = vmatpush.msra.mxu0 %v365
        %578 = vmatpush.msra.mxu0 %v361
        %579 = vmatpush.msra.mxu0 %v357
        %580 = vmatpush.msra.mxu0 %v353
        %581 = vmatpush.msra.mxu0 %v349
        %582 = vmatpush.msra.mxu0 %v345
        %583 = vmatmul.f32.gmra.mxu0 %v275
        %v584 = vpop.f32.mrf.mxu0
        %v585 = vadd.f32 %v562, %v584
        %586 = vmatmul.f32.gmra.mxu0 %v277
        %v587 = vpop.f32.mrf.mxu0
        %v588 = vadd.f32 %v565, %v587
        %589 = vdwg.mxu0
        %v590 = vxor.u32 %v447, 2147483648
        %v591 = vxor.u32 %v493, 2147483648
        %v592 = vxor.u32 %v450, 2147483648
        %v593 = vxor.u32 %v496, 2147483648
        %v594 = vmul.f32 %v590, 1.442695
        %v595 = vpow.pop %v594
        %v596 = vmul.f32 %v591, 1.442695
        %v597 = vpow.pop %v596
        %v598 = vmul.f32 %v592, 1.442695
        %v599 = vpow.pop %v598
        %v600 = vmul.f32 %v593, 1.442695
        %v601 = vpow.pop %v600
        %v602 = vadd.f32 %v595, 1.0
        %v603 = vadd.f32 %v597, 1.0
        %v604 = vadd.f32 %v599, 1.0
        %v605 = vadd.f32 %v601, 1.0
        %v606 = vrcp.pop %v602
        %v607 = vmul.f32 %v602, %v606
        %v608 = vsub.f32 1.0, %v607
        %v609 = vmul.f32 %v606, %v608
        %v610 = vadd.f32 %v606, %v609
        %vm611 = vweird.f32 %v602
        %vm612 = vweird.f32 %v606
        %vm613 = vmor %vm611, %vm612
        %v614 = vsel %vm613, %v606, %v610
        %v615 = vand.u32 2147483647, %v602
        %vm616 = vcmp.eq.f32.partialorder %v615, 8.507059e+37
        %v617 = vand.u32 %v602, 2147483648
        %v618 = vor.u32 1.1754944e-38, %v617
        %v619 = vsel %vm616, %v618, %v614
        %v620 = vmul.f32 1.0, %v619
        %v621 = vrcp.pop %v603
        %v622 = vmul.f32 %v603, %v621
        %v623 = vsub.f32 1.0, %v622
        %v624 = vmul.f32 %v621, %v623
        %v625 = vadd.f32 %v621, %v624
        %vm626 = vweird.f32 %v603
        %vm627 = vweird.f32 %v621
        %vm628 = vmor %vm626, %vm627
        %v629 = vsel %vm628, %v621, %v625
        %v630 = vand.u32 2147483647, %v603
        %vm631 = vcmp.eq.f32.partialorder %v630, 8.507059e+37
        %v632 = vand.u32 %v603, 2147483648
        %v633 = vor.u32 1.1754944e-38, %v632
        %v634 = vsel %vm631, %v633, %v629
        %v635 = vmul.f32 1.0, %v634
        %v636 = vrcp.pop %v604
        %v637 = vmul.f32 %v604, %v636
        %v638 = vsub.f32 1.0, %v637
        %v639 = vmul.f32 %v636, %v638
        %v640 = vadd.f32 %v636, %v639
        %vm641 = vweird.f32 %v604
        %vm642 = vweird.f32 %v636
        %vm643 = vmor %vm641, %vm642
        %v644 = vsel %vm643, %v636, %v640
        %v645 = vand.u32 2147483647, %v604
        %vm646 = vcmp.eq.f32.partialorder %v645, 8.507059e+37
        %v647 = vand.u32 %v604, 2147483648
        %v648 = vor.u32 1.1754944e-38, %v647
        %v649 = vsel %vm646, %v648, %v644
        %v650 = vmul.f32 1.0, %v649
        %v651 = vrcp.pop %v605
        %v652 = vmul.f32 %v605, %v651
        %v653 = vsub.f32 1.0, %v652
        %v654 = vmul.f32 %v651, %v653
        %v655 = vadd.f32 %v651, %v654
        %vm656 = vweird.f32 %v605
        %vm657 = vweird.f32 %v651
        %vm658 = vmor %vm656, %vm657
        %v659 = vsel %vm658, %v651, %v655
        %v660 = vand.u32 2147483647, %v605
        %vm661 = vcmp.eq.f32.partialorder %v660, 8.507059e+37
        %v662 = vand.u32 %v605, 2147483648
        %v663 = vor.u32 1.1754944e-38, %v662
        %v664 = vsel %vm661, %v663, %v659
        %v665 = vmul.f32 1.0, %v664
        %v666 = vmul.f32 %v447, %v620
        %v667 = vmul.f32 %v493, %v635
        %v668 = vmul.f32 %v450, %v650
        %v669 = vmul.f32 %v496, %v665
        %v670 = vmul.f32 %v666, %v539
        %v671 = vmul.f32 %v667, %v585
        %v672 = vmul.f32 %v668, %v542
        %v673 = vmul.f32 %v669, %v588
        %v674 = vld [vmem:[#allocation2] sm:$0xff]
        %v675 = vld [vmem:[#allocation2 + $0x8] sm:$0xff]
        %v676 = vld [vmem:[#allocation2 + $0x10] sm:$0xff]
        %v677 = vld [vmem:[#allocation2 + $0x18] sm:$0xff]
        %v678 = vld [vmem:[%s238] sm:$0xff]
        %v679 = vld [vmem:[%s238 + $0x8] sm:$0xff]
        %v680 = vld [vmem:[%s238 + $0x10] sm:$0xff]
        %v681 = vld [vmem:[%s238 + $0x18] sm:$0xff]
        %v682 = vld [vmem:[%s238 + $0x20] sm:$0xff]
        %v683 = vld [vmem:[%s238 + $0x28] sm:$0xff]
        %v684 = vld [vmem:[%s238 + $0x30] sm:$0xff]
        %v685 = vld [vmem:[%s238 + $0x38] sm:$0xff]
        %v686 = vld [vmem:[%s238 + $0x40] sm:$0xff]
        %v687 = vld [vmem:[%s238 + $0x48] sm:$0xff]
        %v688 = vld [vmem:[%s238 + $0x50] sm:$0xff]
        %v689 = vld [vmem:[%s238 + $0x58] sm:$0xff]
        %v690 = vld [vmem:[%s238 + $0x60] sm:$0xff]
        %v691 = vld [vmem:[%s238 + $0x68] sm:$0xff]
        %v692 = vld [vmem:[%s238 + $0x70] sm:$0xff]
        %v693 = vld [vmem:[%s238 + $0x78] sm:$0xff]
        %v694 = vld [vmem:[%s238 + $0x80] sm:$0xff]
        %v695 = vld [vmem:[%s238 + $0x88] sm:$0xff]
        %v696 = vld [vmem:[%s238 + $0x90] sm:$0xff]
        %v697 = vld [vmem:[%s238 + $0x98] sm:$0xff]
        %v698 = vld [vmem:[%s238 + $0xa0] sm:$0xff]
        %v699 = vld [vmem:[%s238 + $0xa8] sm:$0xff]
        %v700 = vld [vmem:[%s238 + $0xb0] sm:$0xff]
        %v701 = vld [vmem:[%s238 + $0xb8] sm:$0xff]
        %v702 = vld [vmem:[%s238 + $0xc0] sm:$0xff]
        %v703 = vld [vmem:[%s238 + $0xc8] sm:$0xff]
        %v704 = vld [vmem:[%s238 + $0xd0] sm:$0xff]
        %v705 = vld [vmem:[%s238 + $0xd8] sm:$0xff]
        %v706 = vld [vmem:[%s238 + $0xe0] sm:$0xff]
        %v707 = vld [vmem:[%s238 + $0xe8] sm:$0xff]
        %v708 = vld [vmem:[%s238 + $0xf0] sm:$0xff]
        %v709 = vld [vmem:[%s238 + $0xf8] sm:$0xff]
        %v710 = vld [vmem:[%s238 + $0x100] sm:$0xff]
        %v711 = vld [vmem:[%s238 + $0x108] sm:$0xff]
        %v712 = vld [vmem:[%s238 + $0x110] sm:$0xff]
        %v713 = vld [vmem:[%s238 + $0x118] sm:$0xff]
        %v714 = vld [vmem:[%s238 + $0x120] sm:$0xff]
        %v715 = vld [vmem:[%s238 + $0x128] sm:$0xff]
        %v716 = vld [vmem:[%s238 + $0x130] sm:$0xff]
        %v717 = vld [vmem:[%s238 + $0x138] sm:$0xff]
        %v718 = vld [vmem:[%s238 + $0x140] sm:$0xff]
        %v719 = vld [vmem:[%s238 + $0x148] sm:$0xff]
        %v720 = vld [vmem:[%s238 + $0x150] sm:$0xff]
        %v721 = vld [vmem:[%s238 + $0x158] sm:$0xff]
        %v722 = vld [vmem:[%s238 + $0x160] sm:$0xff]
        %v723 = vld [vmem:[%s238 + $0x168] sm:$0xff]
        %v724 = vld [vmem:[%s238 + $0x170] sm:$0xff]
        %v725 = vld [vmem:[%s238 + $0x178] sm:$0xff]
        %v726 = vld [vmem:[%s238 + $0x180] sm:$0xff]
        %v727 = vld [vmem:[%s238 + $0x188] sm:$0xff]
        %v728 = vld [vmem:[%s238 + $0x190] sm:$0xff]
        %v729 = vld [vmem:[%s238 + $0x198] sm:$0xff]
        %v730 = vld [vmem:[%s238 + $0x1a0] sm:$0xff]
        %v731 = vld [vmem:[%s238 + $0x1a8] sm:$0xff]
        %v732 = vld [vmem:[%s238 + $0x1b0] sm:$0xff]
        %v733 = vld [vmem:[%s238 + $0x1b8] sm:$0xff]
        %v734 = vld [vmem:[%s238 + $0x1c0] sm:$0xff]
        %v735 = vld [vmem:[%s238 + $0x1c8] sm:$0xff]
        %v736 = vld [vmem:[%s238 + $0x1d0] sm:$0xff]
        %v737 = vld [vmem:[%s238 + $0x1d8] sm:$0xff]
        %v738 = vld [vmem:[%s238 + $0x1e0] sm:$0xff]
        %v739 = vld [vmem:[%s238 + $0x1e8] sm:$0xff]
        %v740 = vld [vmem:[%s238 + $0x1f0] sm:$0xff]
        %v741 = vld [vmem:[%s238 + $0x1f8] sm:$0xff]
        %742 = vmatpush.msra.mxu0 %v708
        %743 = vmatpush.msra.mxu0 %v706
        %744 = vmatpush.msra.mxu0 %v704
        %745 = vmatpush.msra.mxu0 %v702
        %746 = vmatpush.msra.mxu0 %v700
        %747 = vmatpush.msra.mxu0 %v698
        %748 = vmatpush.msra.mxu0 %v696
        %749 = vmatpush.msra.mxu0 %v694
        %750 = vmatpush.msra.mxu0 %v692
        %751 = vmatpush.msra.mxu0 %v690
        %752 = vmatpush.msra.mxu0 %v688
        %753 = vmatpush.msra.mxu0 %v686
        %754 = vmatpush.msra.mxu0 %v684
        %755 = vmatpush.msra.mxu0 %v682
        %756 = vmatpush.msra.mxu0 %v680
        %757 = vmatpush.msra.mxu0 %v678
        %758 = vmatmul.f32.gmra.mxu0 %v670
        %v759 = vpop.f32.mrf.mxu0
        %v760 = vadd.f32 0.0, %v759
        %761 = vmatmul.f32.gmra.mxu0 %v672
        %v762 = vpop.f32.mrf.mxu0
        %v763 = vadd.f32 0.0, %v762
        %764 = vdwg.mxu0
        %765 = vmatpush.msra.mxu0 %v740
        %766 = vmatpush.msra.mxu0 %v738
        %767 = vmatpush.msra.mxu0 %v736
        %768 = vmatpush.msra.mxu0 %v734
        %769 = vmatpush.msra.mxu0 %v732
        %770 = vmatpush.msra.mxu0 %v730
        %771 = vmatpush.msra.mxu0 %v728
        %772 = vmatpush.msra.mxu0 %v726
        %773 = vmatpush.msra.mxu0 %v724
        %774 = vmatpush.msra.mxu0 %v722
        %775 = vmatpush.msra.mxu0 %v720
        %776 = vmatpush.msra.mxu0 %v718
        %777 = vmatpush.msra.mxu0 %v716
        %778 = vmatpush.msra.mxu0 %v714
        %779 = vmatpush.msra.mxu0 %v712
        %780 = vmatpush.msra.mxu0 %v710
        %781 = vmatmul.f32.gmra.mxu0 %v671
        %v782 = vpop.f32.mrf.mxu0
        %v783 = vadd.f32 %v760, %v782
        %784 = vmatmul.f32.gmra.mxu0 %v673
        %v785 = vpop.f32.mrf.mxu0
        %v786 = vadd.f32 %v763, %v785
        %787 = vdwg.mxu0
        %788 = vmatpush.msra.mxu0 %v709
        %789 = vmatpush.msra.mxu0 %v707
        %790 = vmatpush.msra.mxu0 %v705
        %791 = vmatpush.msra.mxu0 %v703
        %792 = vmatpush.msra.mxu0 %v701
        %793 = vmatpush.msra.mxu0 %v699
        %794 = vmatpush.msra.mxu0 %v697
        %795 = vmatpush.msra.mxu0 %v695
        %796 = vmatpush.msra.mxu0 %v693
        %797 = vmatpush.msra.mxu0 %v691
        %798 = vmatpush.msra.mxu0 %v689
        %799 = vmatpush.msra.mxu0 %v687
        %800 = vmatpush.msra.mxu0 %v685
        %801 = vmatpush.msra.mxu0 %v683
        %802 = vmatpush.msra.mxu0 %v681
        %803 = vmatpush.msra.mxu0 %v679
        %804 = vmatmul.f32.gmra.mxu0 %v670
        %v805 = vpop.f32.mrf.mxu0
        %v806 = vadd.f32 0.0, %v805
        %807 = vmatmul.f32.gmra.mxu0 %v672
        %v808 = vpop.f32.mrf.mxu0
        %v809 = vadd.f32 0.0, %v808
        %810 = vdwg.mxu0
        %811 = vmatpush.msra.mxu0 %v741
        %812 = vmatpush.msra.mxu0 %v739
        %813 = vmatpush.msra.mxu0 %v737
        %814 = vmatpush.msra.mxu0 %v735
        %815 = vmatpush.msra.mxu0 %v733
        %816 = vmatpush.msra.mxu0 %v731
        %817 = vmatpush.msra.mxu0 %v729
        %818 = vmatpush.msra.mxu0 %v727
        %819 = vmatpush.msra.mxu0 %v725
        %820 = vmatpush.msra.mxu0 %v723
        %821 = vmatpush.msra.mxu0 %v721
        %822 = vmatpush.msra.mxu0 %v719
        %823 = vmatpush.msra.mxu0 %v717
        %824 = vmatpush.msra.mxu0 %v715
        %825 = vmatpush.msra.mxu0 %v713
        %826 = vmatpush.msra.mxu0 %v711
        %827 = vmatmul.f32.gmra.mxu0 %v671
        %v828 = vpop.f32.mrf.mxu0
        %v829 = vadd.f32 %v806, %v828
        %830 = vmatmul.f32.gmra.mxu0 %v673
        %v831 = vpop.f32.mrf.mxu0
        %v832 = vadd.f32 %v809, %v831
        %833 = vdwg.mxu0
        %v834 = vadd.f32 %v674, %v783
        %v835 = vadd.f32 %v675, %v829
        %v836 = vadd.f32 %v676, %v786
        %v837 = vadd.f32 %v677, %v832
        %838 = vst [vmem:[#allocation2] sm:$0xff] %v834
        %839 = vst [vmem:[#allocation2 + $0x8] sm:$0xff] %v835
        %840 = vst [vmem:[#allocation2 + $0x10] sm:$0xff] %v836
        %841 = vst [vmem:[#allocation2 + $0x18] sm:$0xff] %v837
        %p842 = scmp.eq.s32.totalorder %s24, 2
        // Predicated region
        $region49: #{tpu_custom_call.1} parent=31 // pred_check
          %p843 = pneg %p842
        $region50: #{tpu_custom_call.1} parent=31 // pred_check_branch
          %845 = sbr.rel (%p843) target = $region52
        $region51: #{tpu_custom_call.1} parent=31 // pred_region
          %v846 = vld [vmem:[#allocation2] sm:$0xff]
          %v847 = vld [vmem:[#allocation2 + $0x8] sm:$0xff]
          %v848 = vld [vmem:[#allocation2 + $0x10] sm:$0xff]
          %v849 = vld [vmem:[#allocation2 + $0x18] sm:$0xff]
          %850 = vst [vmem:[#allocation9] sm:$0xff] %v846
          %851 = vst [vmem:[#allocation9 + $0x8] sm:$0xff] %v847
          %852 = vst [vmem:[#allocation9 + $0x10] sm:$0xff] %v848
          %853 = vst [vmem:[#allocation9 + $0x18] sm:$0xff] %v849
        $region52: #{tpu_custom_call.1} parent=31 // pred_fallthru
          _
        // Predicated region
        $region53: #{tpu_custom_call.1} parent=31 // pred_check
          %p854 = pneg %p127
        $region54: #{tpu_custom_call.1} parent=31 // pred_check_branch
          %856 = sbr.rel (%p854) target = $region56
        $region55: #{tpu_custom_call.1} parent=31 // pred_region
          %s857 = smul.u32 2, %s23
          %859 = vsyncadd [#allocation5], 0
          %s860 = smul.addr %s857, 2
          %s861 = smul.addr %s860, 8
          %s862 = scalar_lea.hbm %s3, %s861
          %s863 = sshll.u32 [#allocation9], 4
          %s864 = int_to_ptr.vmem [resolvable:$true] %s863
          %s865 = sshll.u32 %s862, 4
          %s866 = int_to_ptr.hbm [resolvable:$true] %s865
          %871 = dma.vmem_to_hbm [thread:$0]  %s864, 512, %s866, [#allocation5], 256, 256, 16
        $region56: #{tpu_custom_call.1} parent=31 // pred_fallthru
          _
        // Predicated region
        $region57: #{tpu_custom_call.1} parent=31 // pred_check
          %p872 = pneg %p127
        $region58: #{tpu_custom_call.1} parent=31 // pred_check_branch
          %874 = sbr.rel (%p872) target = $region60
        $region59: #{tpu_custom_call.1} parent=31 // pred_region
          %876 = dma.done [#allocation5], 512
        $region60: #{tpu_custom_call.1} parent=31 // pred_fallthru
          _
      $region32: #{tpu_custom_call.1} parent=5 // pred_fallthru
        _
      %p877 = scmp.le.s32.totalorder 2, %s14
      // Predicated region
      $region61: #{tpu_custom_call.1} parent=5 // pred_check
        %p878 = pneg %p877
      $region62: #{tpu_custom_call.1} parent=5 // pred_check_branch
        %880 = sbr.rel (%p878) target = $region64
      $region63: #{tpu_custom_call.1} parent=5 // pred_region
        %s881 = ssub.s32 %s14, 2
      $region64: #{tpu_custom_call.1} parent=5 // pred_fallthru
        _
    $region6: #{tpu_custom_call.1} parent=1 // loop_footer
      %s18 = sadd.s32 1, %s14
    $region7: #{tpu_custom_call.1} parent=1 // loop_footer_branch
      %13 = sbr.rel target = $region3
    $region8: #{tpu_custom_call.1} parent=1 // loop_exit
      _
    %882 = vsyncpa [#allocation4], 1
    %s883 = scalar_lea.sflag [#allocation4], 1
    %884 = vsyncpa %s883, 1
    %885 = vsyncpa [#allocation7], 1
    %s886 = scalar_lea.sflag [#allocation7], 1
    %887 = vsyncpa %s886, 1
    %888 = vsyncpa [#allocation5], 1
    %s889 = scalar_lea.sflag [#allocation5], 1
    %890 = vsyncpa %s889, 1

</llo_original>
